<compile_context>
chip_gen: v7x
topology: tpu7x:2x2x1
jax: 0.10.0
libtpu: 0.0.40
codegen_flags: <defaults>
</compile_context>

<pallas_src>
import jax
import jax.numpy as jnp
from jax.experimental import pallas as pl
from jax.experimental.pallas import tpu as pltpu


def basic_gate_kernel(w_ref, b_ref, src_ref, trg_ref, out_ref):
    # src_ref / trg_ref / out_ref: (1, C, TL) VMEM tiles for (batch, L-tile).
    # w_ref: (C, 1) gating conv weight (kernel_size=1 conv == per-position linear)
    # b_ref: (1, 1) gating conv bias, resident in SMEM (scalar read).
    src = src_ref[0].astype(jnp.float32)          # (C, TL)
    trg = trg_ref[0].astype(jnp.float32)          # (C, TL)
    w = w_ref[...]                                # (C, 1), f32
    b = b_ref[0, 0]                               # scalar from SMEM

    # 1x1 Conv1d over channels == weighted channel sum.
    # VPU broadcast-multiply + sublane (XLU) reduce; no M=1 MXU matmul needed.
    pre = jnp.sum(w * src, axis=0, keepdims=True) + b       # (1, TL)
    g = jax.nn.sigmoid(pre)                                  # EUP transcendental

    # Broadcast gate over channels and modulate target.
    out_ref[0] = (trg * g).astype(out_ref.dtype)


def _pick_tile_l(C, L, itemsize, vmem_budget_bytes=16 * 1024 * 1024):
    """Largest lane tile (multiple of 128) whose double-buffered src+trg+out
    tiles (~6 * C * TL * itemsize bytes) fit a conservative VMEM budget that is
    safe on v5e (16 MiB scoped default) and v7x (64 MiB physical VMEM)."""
    if L % 128 != 0:
        # Non-lane-aligned L: use the full length as the block (allowed because
        # it equals the array dimension).
        return L
    cap = vmem_budget_bytes // (6 * C * itemsize)
    cap = max(128, (cap // 128) * 128)
    tl = min(L, cap)
    # Prefer a tile that evenly divides L to avoid a ragged tail block.
    while L % tl != 0 and tl > 128:
        tl -= 128
    return tl


def basic_gate(src, trg, weight, bias, *, tile_l=None):
    """src, trg: (B, C, L); weight: (1, C); bias: (1, 1). Returns (B, C, L)."""
    B, C, L = src.shape
    assert trg.shape == (B, C, L)
    assert weight.shape == (1, C)
    assert bias.shape == (1, 1)

    itemsize = jnp.dtype(trg.dtype).itemsize
    if tile_l is None:
        tile_l = _pick_tile_l(C, L, itemsize)
    n_l = pl.cdiv(L, tile_l)

    # Weight as (C, 1) so the kernel can lane-broadcast it against (C, TL).
    w_col = jnp.asarray(weight, jnp.float32).reshape(C, 1)
    b_smem = jnp.asarray(bias, jnp.float32).reshape(1, 1)

    cost = pl.CostEstimate(
        flops=2 * B * C * L,                    # weighted channel sum + modulate
        transcendentals=B * L,                  # sigmoid
        bytes_accessed=3 * B * C * L * itemsize # src + trg + out HBM traffic
        + C * 4 + 4,
    )

    return pl.pallas_call(
        basic_gate_kernel,
        out_shape=jax.ShapeDtypeStruct((B, C, L), trg.dtype),
        grid_spec=pltpu.PrefetchScalarGridSpec(
            num_scalar_prefetch=0,
            grid=(B, n_l),
            in_specs=[
                # weight: tiny resident (C, 1) VMEM tile, replicated per step.
                pl.BlockSpec((C, 1), lambda b, l: (0, 0)),
                # bias: scalar, kept out of lane-padded VMEM -> SMEM.
                pl.BlockSpec(memory_space=pltpu.MemorySpace.SMEM),
                # src / trg: lane-dense (1, C, TL) tiles over (batch, L-tile).
                pl.BlockSpec((1, C, tile_l), lambda b, l: (b, 0, l)),
                pl.BlockSpec((1, C, tile_l), lambda b, l: (b, 0, l)),
            ],
            out_specs=pl.BlockSpec((1, C, tile_l), lambda b, l: (b, 0, l)),
        ),
        compiler_params=pltpu.CompilerParams(
            dimension_semantics=("parallel", "parallel"),
        ),
        cost_estimate=cost,
    )(w_col, b_smem, src, trg)


def basic_gate_ref(src, trg, weight, bias):
    # Pure-JAX reference of the PyTorch forward.
    pre = jnp.einsum("oc,bcl->bol", weight, src) + bias[None, :, :]  # (B, 1, L)
    g = jax.nn.sigmoid(pre)
    return trg * g


if __name__ == "__main__":
    key = jax.random.PRNGKey(0)
    k_src, k_trg, k_w, k_b = jax.random.split(key, 4)

    B, C, L = 2, 8, 1024  # small shapes; L lane-aligned (multiple of 128)

    src = jax.random.normal(k_src, (B, C, L), dtype=jnp.float32)
    trg = jax.random.normal(k_trg, (B, C, L), dtype=jnp.float32)

    # Deterministic "Conv1d(C, 1, kernel_size=1)" parameters: weight (1, C, 1)
    # in PyTorch; squeezed to (1, C) here. Uniform(-1/sqrt(C), 1/sqrt(C)) init.
    bound = 1.0 / jnp.sqrt(jnp.float32(C))
    weight = jax.random.uniform(k_w, (1, C), jnp.float32, -bound, bound)
    bias = jax.random.uniform(k_b, (1, 1), jnp.float32, -bound, bound)

    ref = basic_gate_ref(src, trg, weight, bias)

    # Default (auto-picked) tile — single L tile for this small shape.
    out = jax.block_until_ready(basic_gate(src, trg, weight, bias))
    assert jnp.allclose(out, ref, atol=1e-5, rtol=1e-5), "mismatch vs reference"

    # Explicit smaller tile to also exercise the multi-tile L pipeline path.
    out_tiled = jax.block_until_ready(
        basic_gate(src, trg, weight, bias, tile_l=256))
    assert jnp.allclose(out_tiled, ref, atol=1e-5, rtol=1e-5), \
        "mismatch vs reference (tiled path)"

    print("KERNEL_OK")
</pallas_src>

<mosaic_0001>
module attributes {stable_mosaic.version = 11 : i64} {
  func.func @basic_gate_kernel(%arg0: i32, %arg1: i32, %arg2: memref<8x1xf32, #tpu.memory_space<vmem>>, %arg3: memref<1x1xf32, #tpu.memory_space<smem>>, %arg4: memref<1x8x1024xf32, #tpu.memory_space<vmem>>, %arg5: memref<1x8x1024xf32, #tpu.memory_space<vmem>>, %arg6: memref<1x8x1024xf32, #tpu.memory_space<vmem>>) attributes {dimension_semantics = [#tpu.dimension_semantics<parallel>, #tpu.dimension_semantics<parallel>], iteration_bounds = array<i64: 2, 1>, scalar_prefetch = 0 : i64, scratch_operands = 0 : i64, tpu.core_type = #tpu.core_type<tc>, window_params = [{pipeline_mode = #tpu.pipeline_mode<synchronous>, transform_indices = @transform_0, window_bounds = array<i64: 8, 1>}, {transform_indices = @transform_1, window_bounds = array<i64: 1, 1>}, {transform_indices = @transform_2, window_bounds = array<i64: 1, 8, 1024>}, {transform_indices = @transform_3, window_bounds = array<i64: 1, 8, 1024>}, {transform_indices = @transform_4, window_bounds = array<i64: 1, 8, 1024>}]} {
    %c0 = arith.constant 0 : index
    %c0_0 = arith.constant 0 : index
    %c0_1 = arith.constant 0 : index
    %0 = vector.load %arg4[%c0, %c0_0, %c0_1] : memref<1x8x1024xf32, #tpu.memory_space<vmem>>, vector<1x8x1024xf32>
    %1 = vector.shape_cast %0 : vector<1x8x1024xf32> to vector<8x1024xf32>
    %c0_2 = arith.constant 0 : index
    %c0_3 = arith.constant 0 : index
    %c0_4 = arith.constant 0 : index
    %2 = vector.load %arg5[%c0_2, %c0_3, %c0_4] : memref<1x8x1024xf32, #tpu.memory_space<vmem>>, vector<1x8x1024xf32>
    %3 = vector.shape_cast %2 : vector<1x8x1024xf32> to vector<8x1024xf32>
    %c0_5 = arith.constant 0 : index
    %c0_6 = arith.constant 0 : index
    %4 = vector.load %arg2[%c0_5, %c0_6] : memref<8x1xf32, #tpu.memory_space<vmem>>, vector<8x1xf32>
    %c0_7 = arith.constant 0 : index
    %c0_8 = arith.constant 0 : index
    %5 = memref.load %arg3[%c0_7, %c0_8] : memref<1x1xf32, #tpu.memory_space<smem>>
    %6 = vector.broadcast %4 : vector<8x1xf32> to vector<8x1024xf32>
    %7 = arith.mulf %6, %1 : vector<8x1024xf32>
    %cst = arith.constant dense<0.000000e+00> : vector<1024xf32>
    %8 = vector.multi_reduction <add>, %7, %cst [0] : vector<8x1024xf32> to vector<1024xf32>
    %9 = vector.shape_cast %8 : vector<1024xf32> to vector<1x1024xf32>
    %10 = vector.broadcast %5 : f32 to vector<1x1024xf32>
    %11 = arith.addf %9, %10 : vector<1x1024xf32>
    %12 = arith.negf %11 : vector<1x1024xf32>
    %13 = math.exp %12 : vector<1x1024xf32>
    %cst_9 = arith.constant 1.000000e+00 : f32
    %14 = vector.broadcast %cst_9 : f32 to vector<1x1024xf32>
    %15 = arith.addf %14, %13 : vector<1x1024xf32>
    %16 = arith.divf %14, %15 : vector<1x1024xf32>
    %17 = vector.broadcast %16 : vector<1x1024xf32> to vector<8x1024xf32>
    %18 = arith.mulf %3, %17 : vector<8x1024xf32>
    %c0_10 = arith.constant 0 : index
    %c0_11 = arith.constant 0 : index
    %c0_12 = arith.constant 0 : index
    %19 = vector.load %arg6[%c0_10, %c0_11, %c0_12] : memref<1x8x1024xf32, #tpu.memory_space<vmem>>, vector<1x8x1024xf32>
    %20 = vector.shape_cast %19 : vector<1x8x1024xf32> to vector<8x1024xf32>
    %21 = vector.shape_cast %18 : vector<8x1024xf32> to vector<1x8x1024xf32>
    tpu.vector_store %arg6[%c0_10, %c0_11, %c0_12], %21 {strides = array<i32>} : memref<1x8x1024xf32, #tpu.memory_space<vmem>>, vector<1x8x1024xf32>,
    return
  }
  func.func @transform_0(%arg0: i32, %arg1: i32) -> (i32, i32) {
    %c0_i32 = arith.constant 0 : i32
    %c0_i32_0 = arith.constant 0 : i32
    %c0_i32_1 = arith.constant 0 : i32
    return %c0_i32, %c0_i32_0 : i32, i32
  }
  func.func @transform_1(%arg0: i32, %arg1: i32) -> (i32, i32) {
    %c0_i32 = arith.constant 0 : i32
    %c0_i32_0 = arith.constant 0 : i32
    %c0_i32_1 = arith.constant 0 : i32
    return %c0_i32, %c0_i32_0 : i32, i32
  }
  func.func @transform_2(%arg0: i32, %arg1: i32) -> (i32, i32, i32) {
    %c0_i32 = arith.constant 0 : i32
    %c0_i32_0 = arith.constant 0 : i32
    return %arg0, %c0_i32, %arg1 : i32, i32, i32
  }
  func.func @transform_3(%arg0: i32, %arg1: i32) -> (i32, i32, i32) {
    %c0_i32 = arith.constant 0 : i32
    %c0_i32_0 = arith.constant 0 : i32
    return %arg0, %c0_i32, %arg1 : i32, i32, i32
  }
  func.func @transform_4(%arg0: i32, %arg1: i32) -> (i32, i32, i32) {
    %c0_i32 = arith.constant 0 : i32
    %c0_i32_0 = arith.constant 0 : i32
    return %arg0, %c0_i32, %arg1 : i32, i32, i32
  }
}

</mosaic_0001>

<llo_original>
// kernel: tpu_custom_call.1
$region0: #{tpu_custom_call.1}
  #allocation0 [shape = 'u32[]', space=smem, size = 0x4, offset = 0x4, fixed_abs, tag = 'smem constant byte address 0x4 - core index']
  #allocation1 [shape = 'u32[144,128]{1,0:T(1,128)}', space=vmem, size = 0x12000, scoped, tag = 'internal scratch']
  #allocation2 [shape = 'f32[1,1]{1,0:T(1,128)S(6)}', space=smem, size = 0x200, scoped, tag = 'scoped memory for tpu_custom_call.1']
  %s0 = inlined_call_operand.vmem [shape: f32[8,1], index: 0, kind: input, shape index: {}]
  %s1 = inlined_call_operand.<no memory space> [shape: f32[1,1], index: 1, kind: input, shape index: {}]
  %s2 = inlined_call_operand.hbm [shape: f32[2,8,1024], index: 2, kind: input, shape index: {}]
  %s3 = inlined_call_operand.hbm [shape: f32[2,8,1024], index: 3, kind: input, shape index: {}]
  %s4 = inlined_call_operand.hbm [shape: f32[2,8,1024], index: 4, kind: output, shape index: {}]
  %s5 = sld [smem:[#allocation0]]
  $region57: #{tpu_custom_call.1} parent=0
    _
  %s7 = ssub.s32 1, %s5
  %s8 = scalar_select 0, %s7, %s5
  %9 = sst [smem:[#allocation2]] %s1
  $region1: #{tpu_custom_call.1} parent=0
    #allocation3 [shape = 'u8[65536]{0}', space=vmem, size = 0x10000, scoped, tag = 'input window, operand 2']
    #allocation4 [shape = 's32[2]{0}', space=sflag, size = 0x8, scoped, tag = 'scoped memory for tpu_custom_call.1']
    #allocation5 [shape = 's32[2]{0}', space=sflag, size = 0x8, scoped, tag = 'scoped memory for tpu_custom_call.1']
    #allocation6 [shape = 'u8[65536]{0}', space=vmem, size = 0x10000, scoped, tag = 'input window, operand 3']
    #allocation7 [shape = 's32[2]{0}', space=sflag, size = 0x8, scoped, tag = 'scoped memory for tpu_custom_call.1']
    #allocation8 [shape = 'u8[65536]{0}', space=vmem, size = 0x10000, scoped, tag = 'output window, operand 0']
    %10 = vsyncpa [#allocation4], 0
    %s11 = scalar_lea.sflag [#allocation4], 1
    %12 = vsyncpa %s11, 0
    %13 = vsyncpa [#allocation7], 0
    %s14 = scalar_lea.sflag [#allocation7], 1
    %15 = vsyncpa %s14, 0
    %16 = vsyncpa [#allocation5], 0
    %s17 = scalar_lea.sflag [#allocation5], 1
    %18 = vsyncpa %s17, 0
    loop: start=0, step=1, limit=4
    $region2: #{tpu_custom_call.1} parent=1 // loop_pre_header
      _
    $region3: #{tpu_custom_call.1} parent=1 // loop_header
      %s20 = sphi 0, %s24
      %p21 = scmp.ge.s32.totalorder %s20, 4
      %s27 = sphi 0, %s39
      %s28 = sphi 0, %s35
      %s29 = sphi 0, %s27
      %s30 = sphi 0, %s28
      %s31 = sphi 0, %s29
      %s32 = sphi 0, %s30
      %s40 = sphi 0, %s40
      %s42 = sphi 0, %s40
      %s43 = sphi 0, %s42
      %s57 = sphi 0, %s43
      %s61 = sphi 0, %s61
      %s63 = sphi 0, %s61
      %s64 = sphi 0, %s63
      %s78 = sphi 0, %s64
      %s86 = sphi 0, %s88
      %s89 = sphi 0, %s86
      %s90 = sphi 0, %s89
      %s106 = sphi 0, %s90
      %s114 = sphi 0, %s116
      %s117 = sphi 0, %s114
      %s118 = sphi 0, %s117
      %s134 = sphi 0, %s118
      %s142 = sphi 0, %s144
      %s145 = sphi 0, %s142
      %s146 = sphi 0, %s145
      %s162 = sphi 0, %s146
    $region4: #{tpu_custom_call.1} parent=1 // loop_header_branch
      %23 = sbr.rel (%p21) target = $region8
    $region5: #{tpu_custom_call.1} parent=1 // loop_body
      %s25 = ssub.s32 %s20, 1
      %s26 = ssub.s32 %s20, 2
      %s33 = sadd.s32 1, %s28
      %p34 = scmp.ge.s32.totalorder %s33, 1
      %s35 = scalar_select %p34, 0, %s33
      %s36 = sadd.s32 1, %s27
      %s37 = scalar_select %p34, %s36, %s27
      %p38 = scmp.ge.s32.totalorder %s37, 2
      %s39 = scalar_select %p38, 0, %s37
      %s41 = sadd.s32 %s40, 1
      %p44 = scmp.eq.s32.totalorder %s20, 1
      %p45 = scmp.ne.s32.totalorder %s40, %s42
      %p46 = scmp.eq.s32.totalorder %s20, 0
      %p47 = por %p45, %p46
      %p48 = scmp.ne.s32.totalorder %s40, %s42
      %p49 = scmp.eq.s32.totalorder %s25, 1
      %p50 = por %p48, %p49
      %p51 = scmp.ne.s32.totalorder %s42, %s43
      %p52 = scmp.eq.s32.totalorder %s25, 0
      %p53 = por %p51, %p52
      %p54 = scmp.ne.s32.totalorder %s42, %s43
      %p55 = scmp.eq.s32.totalorder %s26, 1
      %p56 = por %p54, %p55
      %p58 = scmp.ne.s32.totalorder %s43, %s57
      %p59 = scmp.eq.s32.totalorder %s26, 0
      %p60 = por %p58, %p59
      %s62 = sadd.s32 %s61, 1
      %p65 = scmp.eq.s32.totalorder %s20, 1
      %p66 = scmp.ne.s32.totalorder %s61, %s63
      %p67 = scmp.eq.s32.totalorder %s20, 0
      %p68 = por %p66, %p67
      %p69 = scmp.ne.s32.totalorder %s61, %s63
      %p70 = scmp.eq.s32.totalorder %s25, 1
      %p71 = por %p69, %p70
      %p72 = scmp.ne.s32.totalorder %s63, %s64
      %p73 = scmp.eq.s32.totalorder %s25, 0
      %p74 = por %p72, %p73
      %p75 = scmp.ne.s32.totalorder %s63, %s64
      %p76 = scmp.eq.s32.totalorder %s26, 1
      %p77 = por %p75, %p76
      %p79 = scmp.ne.s32.totalorder %s64, %s78
      %p80 = scmp.eq.s32.totalorder %s26, 0
      %p81 = por %p79, %p80
      %s82 = ssub.s32 %s27, %s39
      %s83 = ssub.s32 %s28, %s35
      %s84 = sor.u32 %s82, %s83
      %p85 = scmp.eq.s32.totalorder %s84, 0
      %s87 = sadd.s32 %s86, 1
      %s88 = scalar_select %p85, %s86, %s87
      %p91 = pneg %p85
      %p92 = scmp.eq.s32.totalorder %s20, 1
      %p93 = por %p91, %p92
      %p94 = scmp.ne.s32.totalorder %s86, %s89
      %p95 = scmp.eq.s32.totalorder %s20, 0
      %p96 = por %p94, %p95
      %p97 = scmp.ne.s32.totalorder %s86, %s89
      %p98 = scmp.eq.s32.totalorder %s25, 1
      %p99 = por %p97, %p98
      %p100 = scmp.ne.s32.totalorder %s89, %s90
      %p101 = scmp.eq.s32.totalorder %s25, 0
      %p102 = por %p100, %p101
      %p103 = scmp.ne.s32.totalorder %s89, %s90
      %p104 = scmp.eq.s32.totalorder %s26, 1
      %p105 = por %p103, %p104
      %p107 = scmp.ne.s32.totalorder %s90, %s106
      %p108 = scmp.eq.s32.totalorder %s26, 0
      %p109 = por %p107, %p108
      %s110 = ssub.s32 %s27, %s39
      %s111 = ssub.s32 %s28, %s35
      %s112 = sor.u32 %s110, %s111
      %p113 = scmp.eq.s32.totalorder %s112, 0
      %s115 = sadd.s32 %s114, 1
      %s116 = scalar_select %p113, %s114, %s115
      %p119 = pneg %p113
      %p120 = scmp.eq.s32.totalorder %s20, 1
      %p121 = por %p119, %p120
      %p122 = scmp.ne.s32.totalorder %s114, %s117
      %p123 = scmp.eq.s32.totalorder %s20, 0
      %p124 = por %p122, %p123
      %p125 = scmp.ne.s32.totalorder %s114, %s117
      %p126 = scmp.eq.s32.totalorder %s25, 1
      %p127 = por %p125, %p126
      %p128 = scmp.ne.s32.totalorder %s117, %s118
      %p129 = scmp.eq.s32.totalorder %s25, 0
      %p130 = por %p128, %p129
      %p131 = scmp.ne.s32.totalorder %s117, %s118
      %p132 = scmp.eq.s32.totalorder %s26, 1
      %p133 = por %p131, %p132
      %p135 = scmp.ne.s32.totalorder %s118, %s134
      %p136 = scmp.eq.s32.totalorder %s26, 0
      %p137 = por %p135, %p136
      %s138 = ssub.s32 %s27, %s39
      %s139 = ssub.s32 %s28, %s35
      %s140 = sor.u32 %s138, %s139
      %p141 = scmp.eq.s32.totalorder %s140, 0
      %s143 = sadd.s32 %s142, 1
      %s144 = scalar_select %p141, %s142, %s143
      %p147 = pneg %p141
      %p148 = scmp.eq.s32.totalorder %s20, 1
      %p149 = por %p147, %p148
      %p150 = scmp.ne.s32.totalorder %s142, %s145
      %p151 = scmp.eq.s32.totalorder %s20, 0
      %p152 = por %p150, %p151
      %p153 = scmp.ne.s32.totalorder %s142, %s145
      %p154 = scmp.eq.s32.totalorder %s25, 1
      %p155 = por %p153, %p154
      %p156 = scmp.ne.s32.totalorder %s145, %s146
      %p157 = scmp.eq.s32.totalorder %s25, 0
      %p158 = por %p156, %p157
      %p159 = scmp.ne.s32.totalorder %s145, %s146
      %p160 = scmp.eq.s32.totalorder %s26, 1
      %p161 = por %p159, %p160
      %p163 = scmp.ne.s32.totalorder %s146, %s162
      %p164 = scmp.eq.s32.totalorder %s26, 0
      %p165 = por %p163, %p164
      %p166 = scmp.le.s32.totalorder 1, %s20
      %p167 = scmp.lt.s32.totalorder %s20, 3
      %p168 = pnand %p166, %p167
      %p169 = pneg %p168
      // Predicated region
      $region9: #{tpu_custom_call.1} parent=5 // pred_check
        _
      $region10: #{tpu_custom_call.1} parent=5 // pred_check_branch
        %171 = sbr.rel (%p168) target = $region12
      $region11: #{tpu_custom_call.1} parent=5 // pred_region
        %s172 = ssub.s32 %s20, 1
        // Predicated region
        $region13: #{tpu_custom_call.1} parent=11 // pred_check
          %p173 = pneg %p53
        $region14: #{tpu_custom_call.1} parent=11 // pred_check_branch
          %175 = sbr.rel (%p173) target = $region16
        $region15: #{tpu_custom_call.1} parent=11 // pred_region
          _
        $region16: #{tpu_custom_call.1} parent=11 // pred_fallthru
          _
        // Predicated region
        $region17: #{tpu_custom_call.1} parent=11 // pred_check
          %p176 = pneg %p74
        $region18: #{tpu_custom_call.1} parent=11 // pred_check_branch
          %178 = sbr.rel (%p176) target = $region20
        $region19: #{tpu_custom_call.1} parent=11 // pred_region
          _
        $region20: #{tpu_custom_call.1} parent=11 // pred_fallthru
          _
      $region12: #{tpu_custom_call.1} parent=5 // pred_fallthru
        _
      %p179 = scmp.lt.s32.totalorder %s20, 2
      // Predicated region
      $region21: #{tpu_custom_call.1} parent=5 // pred_check
        %p180 = pneg %p179
      $region22: #{tpu_custom_call.1} parent=5 // pred_check_branch
        %182 = sbr.rel (%p180) target = $region24
      $region23: #{tpu_custom_call.1} parent=5 // pred_region
        // Predicated region
        $region25: #{tpu_custom_call.1} parent=23 // pred_check
          %p183 = pneg %p96
        $region26: #{tpu_custom_call.1} parent=23 // pred_check_branch
          %185 = sbr.rel (%p183) target = $region28
        $region27: #{tpu_custom_call.1} parent=23 // pred_region
          %s186 = sand.u32 %s86, 1
          %s187 = scalar_lea.sflag [#allocation4], %s186
          %s188 = sand.u32 %s86, 1
          %s189 = smul.addr %s188, 64
          %s190 = scalar_lea.vmem [#allocation3], %s189
          %s191 = smul.u32 8, %s28
          %s193 = ssub.s32 1024, 1024
          %194 = vsyncadd %s187, %s193
          %s195 = smul.addr %s27, 8
          %s196 = sadd.s32 %s191, %s195
          %s197 = smul.addr %s196, 128
          %s198 = scalar_lea.hbm %s2, %s197
          %s200 = sshll.u32 %s190, 4
          %s201 = int_to_ptr.vmem [resolvable:$true] %s200
          %203 = dma.hbm_to_vmem [thread:$0]  %s198, 1024, %s201, %s187
        $region28: #{tpu_custom_call.1} parent=23 // pred_fallthru
          _
        // Predicated region
        $region29: #{tpu_custom_call.1} parent=23 // pred_check
          %p204 = pneg %p124
        $region30: #{tpu_custom_call.1} parent=23 // pred_check_branch
          %206 = sbr.rel (%p204) target = $region32
        $region31: #{tpu_custom_call.1} parent=23 // pred_region
          %s207 = sand.u32 %s114, 1
          %s208 = scalar_lea.sflag [#allocation7], %s207
          %s209 = sand.u32 %s114, 1
          %s210 = smul.addr %s209, 64
          %s211 = scalar_lea.vmem [#allocation6], %s210
          %s212 = smul.u32 8, %s28
          %s214 = ssub.s32 1024, 1024
          %215 = vsyncadd %s208, %s214
          %s216 = smul.addr %s27, 8
          %s217 = sadd.s32 %s212, %s216
          %s218 = smul.addr %s217, 128
          %s219 = scalar_lea.hbm %s3, %s218
          %s221 = sshll.u32 %s211, 4
          %s222 = int_to_ptr.vmem [resolvable:$true] %s221
          %224 = dma.hbm_to_vmem [thread:$0]  %s219, 1024, %s222, %s208
        $region32: #{tpu_custom_call.1} parent=23 // pred_fallthru
          _
      $region24: #{tpu_custom_call.1} parent=5 // pred_fallthru
        _
      %p225 = scmp.le.s32.totalorder 1, %s20
      %p226 = scmp.lt.s32.totalorder %s20, 3
      %p227 = pnand %p225, %p226
      %p228 = pneg %p227
      // Predicated region
      $region33: #{tpu_custom_call.1} parent=5 // pred_check
        _
      $region34: #{tpu_custom_call.1} parent=5 // pred_check_branch
        %230 = sbr.rel (%p227) target = $region36
      $region35: #{tpu_custom_call.1} parent=5 // pred_region
        %s231 = ssub.s32 %s20, 1
        %s232 = sand.u32 %s89, 1
        %s233 = scalar_lea.sflag [#allocation4], %s232
        %s234 = sand.u32 %s89, 1
        %s235 = smul.addr %s234, 64
        %s236 = scalar_lea.vmem [#allocation3], %s235
        // Predicated region
        $region37: #{tpu_custom_call.1} parent=35 // pred_check
          %p237 = pneg %p102
        $region38: #{tpu_custom_call.1} parent=35 // pred_check_branch
          %239 = sbr.rel (%p237) target = $region40
        $region39: #{tpu_custom_call.1} parent=35 // pred_region
          %240 = dma.done %s233, 1024
        $region40: #{tpu_custom_call.1} parent=35 // pred_fallthru
          _
        %s241 = sand.u32 %s117, 1
        %s242 = scalar_lea.sflag [#allocation7], %s241
        %s243 = sand.u32 %s117, 1
        %s244 = smul.addr %s243, 64
        %s245 = scalar_lea.vmem [#allocation6], %s244
        // Predicated region
        $region41: #{tpu_custom_call.1} parent=35 // pred_check
          %p246 = pneg %p130
        $region42: #{tpu_custom_call.1} parent=35 // pred_check_branch
          %248 = sbr.rel (%p246) target = $region44
        $region43: #{tpu_custom_call.1} parent=35 // pred_region
          %249 = dma.done %s242, 1024
        $region44: #{tpu_custom_call.1} parent=35 // pred_fallthru
          _
        %p250 = pneg %p53
        %p251 = pneg %p50
        %p252 = pneg %p74
        %p253 = pneg %p71
        %s254 = sand.u32 %s89, 1
        %s255 = scalar_lea.sflag [#allocation4], %s254
        %s256 = sand.u32 %s89, 1
        %s257 = smul.addr %s256, 64
        %s258 = scalar_lea.vmem [#allocation3], %s257
        %p259 = pneg %p102
        %p260 = pneg %p99
        %s261 = sand.u32 %s117, 1
        %s262 = scalar_lea.sflag [#allocation7], %s261
        %s263 = sand.u32 %s117, 1
        %s264 = smul.addr %s263, 64
        %s265 = scalar_lea.vmem [#allocation6], %s264
        %p266 = pneg %p130
        %p267 = pneg %p127
        %p268 = pneg %p158
        %p269 = pneg %p155
        %s270 = sand.u32 %s145, 1
        %s271 = scalar_lea.sflag [#allocation5], %s270
        %s272 = sand.u32 %s145, 1
        %s273 = smul.addr %s272, 64
        %s274 = scalar_lea.vmem [#allocation8], %s273
        %s275 = smul.u32 8, %s30
        %s276 = smul.u32 8, %s30
        %s277 = smul.u32 8, %s30
        %v278 = vld [vmem:[%s236] sm:$0xff]
        %v279 = vld [vmem:[%s236 + $0x8] sm:$0xff]
        %v280 = vld [vmem:[%s236 + $0x10] sm:$0xff]
        %v281 = vld [vmem:[%s236 + $0x18] sm:$0xff]
        %v282 = vld [vmem:[%s236 + $0x20] sm:$0xff]
        %v283 = vld [vmem:[%s236 + $0x28] sm:$0xff]
        %v284 = vld [vmem:[%s236 + $0x30] sm:$0xff]
        %v285 = vld [vmem:[%s236 + $0x38] sm:$0xff]
        %v286 = vld [vmem:[%s245] sm:$0xff]
        %v287 = vld [vmem:[%s245 + $0x8] sm:$0xff]
        %v288 = vld [vmem:[%s245 + $0x10] sm:$0xff]
        %v289 = vld [vmem:[%s245 + $0x18] sm:$0xff]
        %v290 = vld [vmem:[%s245 + $0x20] sm:$0xff]
        %v291 = vld [vmem:[%s245 + $0x28] sm:$0xff]
        %v292 = vld [vmem:[%s245 + $0x30] sm:$0xff]
        %v293 = vld [vmem:[%s245 + $0x38] sm:$0xff]
        %v294 = vld [vmem:[%s0] sm:$0xff]
        %s295 = sld [smem:[#allocation2]]
        %297 = vset.pattern.permute.xlu0 0
        %298 = vperm.xlu0 %297, %v294
        %v299 = vpop.permute.xlu0 %298
        %v301 = vmul.f32 %v299, %v278
        %v302 = vmul.f32 %v299, %v279
        %v303 = vmul.f32 %v299, %v280
        %v304 = vmul.f32 %v299, %v281
        %v305 = vmul.f32 %v299, %v282
        %v306 = vmul.f32 %v299, %v283
        %v307 = vmul.f32 %v299, %v284
        %v308 = vmul.f32 %v299, %v285
        %v309 = vrot.slane %v301, 4
        %v310 = vadd.f32 %v301, %v309
        %v311 = vrot.slane %v310, 2
        %v312 = vadd.f32 %v310, %v311
        %v313 = vrot.slane %v312, 1
        %v314 = vadd.f32 %v312, %v313
        %v315 = vrot.slane %v302, 4
        %v316 = vadd.f32 %v302, %v315
        %v317 = vrot.slane %v316, 2
        %v318 = vadd.f32 %v316, %v317
        %v319 = vrot.slane %v318, 1
        %v320 = vadd.f32 %v318, %v319
        %v321 = vrot.slane %v303, 4
        %v322 = vadd.f32 %v303, %v321
        %v323 = vrot.slane %v322, 2
        %v324 = vadd.f32 %v322, %v323
        %v325 = vrot.slane %v324, 1
        %v326 = vadd.f32 %v324, %v325
        %v327 = vrot.slane %v304, 4
        %v328 = vadd.f32 %v304, %v327
        %v329 = vrot.slane %v328, 2
        %v330 = vadd.f32 %v328, %v329
        %v331 = vrot.slane %v330, 1
        %v332 = vadd.f32 %v330, %v331
        %v333 = vrot.slane %v305, 4
        %v334 = vadd.f32 %v305, %v333
        %v335 = vrot.slane %v334, 2
        %v336 = vadd.f32 %v334, %v335
        %v337 = vrot.slane %v336, 1
        %v338 = vadd.f32 %v336, %v337
        %v339 = vrot.slane %v306, 4
        %v340 = vadd.f32 %v306, %v339
        %v341 = vrot.slane %v340, 2
        %v342 = vadd.f32 %v340, %v341
        %v343 = vrot.slane %v342, 1
        %v344 = vadd.f32 %v342, %v343
        %v345 = vrot.slane %v307, 4
        %v346 = vadd.f32 %v307, %v345
        %v347 = vrot.slane %v346, 2
        %v348 = vadd.f32 %v346, %v347
        %v349 = vrot.slane %v348, 1
        %v350 = vadd.f32 %v348, %v349
        %v351 = vrot.slane %v308, 4
        %v352 = vadd.f32 %v308, %v351
        %v353 = vrot.slane %v352, 2
        %v354 = vadd.f32 %v352, %v353
        %v355 = vrot.slane %v354, 1
        %v356 = vadd.f32 %v354, %v355
        %v357 = vstv %s295
        %v358 = vadd.f32 %v314, %v357
        %v359 = vadd.f32 %v320, %v357
        %v360 = vadd.f32 %v326, %v357
        %v361 = vadd.f32 %v332, %v357
        %v362 = vadd.f32 %v338, %v357
        %v363 = vadd.f32 %v344, %v357
        %v364 = vadd.f32 %v350, %v357
        %v365 = vadd.f32 %v356, %v357
        %v366 = vxor.u32 %v358, 2147483648
        %v367 = vxor.u32 %v359, 2147483648
        %v368 = vxor.u32 %v360, 2147483648
        %v369 = vxor.u32 %v361, 2147483648
        %v370 = vxor.u32 %v362, 2147483648
        %v371 = vxor.u32 %v363, 2147483648
        %v372 = vxor.u32 %v364, 2147483648
        %v373 = vxor.u32 %v365, 2147483648
        %v374 = vmul.f32 %v366, 1.442695
        %v375 = vpow.pop %v374
        %v376 = vmul.f32 %v367, 1.442695
        %v377 = vpow.pop %v376
        %v378 = vmul.f32 %v368, 1.442695
        %v379 = vpow.pop %v378
        %v380 = vmul.f32 %v369, 1.442695
        %v381 = vpow.pop %v380
        %v382 = vmul.f32 %v370, 1.442695
        %v383 = vpow.pop %v382
        %v384 = vmul.f32 %v371, 1.442695
        %v385 = vpow.pop %v384
        %v386 = vmul.f32 %v372, 1.442695
        %v387 = vpow.pop %v386
        %v388 = vmul.f32 %v373, 1.442695
        %v389 = vpow.pop %v388
        %v390 = vadd.f32 %v375, 1.0
        %v391 = vadd.f32 %v377, 1.0
        %v392 = vadd.f32 %v379, 1.0
        %v393 = vadd.f32 %v381, 1.0
        %v394 = vadd.f32 %v383, 1.0
        %v395 = vadd.f32 %v385, 1.0
        %v396 = vadd.f32 %v387, 1.0
        %v397 = vadd.f32 %v389, 1.0
        %v398 = vrcp.pop %v390
        %v399 = vmul.f32 1.0, %v398
        %v400 = vrcp.pop %v391
        %v401 = vmul.f32 1.0, %v400
        %v402 = vrcp.pop %v392
        %v403 = vmul.f32 1.0, %v402
        %v404 = vrcp.pop %v393
        %v405 = vmul.f32 1.0, %v404
        %v406 = vrcp.pop %v394
        %v407 = vmul.f32 1.0, %v406
        %v408 = vrcp.pop %v395
        %v409 = vmul.f32 1.0, %v408
        %v410 = vrcp.pop %v396
        %v411 = vmul.f32 1.0, %v410
        %v412 = vrcp.pop %v397
        %v413 = vmul.f32 1.0, %v412
        %v414 = vmul.f32 %v286, %v399
        %v415 = vmul.f32 %v287, %v401
        %v416 = vmul.f32 %v288, %v403
        %v417 = vmul.f32 %v289, %v405
        %v418 = vmul.f32 %v290, %v407
        %v419 = vmul.f32 %v291, %v409
        %v420 = vmul.f32 %v292, %v411
        %v421 = vmul.f32 %v293, %v413
        %422 = vst [vmem:[%s274] sm:$0xff] %v414
        %423 = vst [vmem:[%s274 + $0x8] sm:$0xff] %v415
        %424 = vst [vmem:[%s274 + $0x10] sm:$0xff] %v416
        %425 = vst [vmem:[%s274 + $0x18] sm:$0xff] %v417
        %426 = vst [vmem:[%s274 + $0x20] sm:$0xff] %v418
        %427 = vst [vmem:[%s274 + $0x28] sm:$0xff] %v419
        %428 = vst [vmem:[%s274 + $0x30] sm:$0xff] %v420
        %429 = vst [vmem:[%s274 + $0x38] sm:$0xff] %v421
        %s430 = sand.u32 %s145, 1
        %s431 = scalar_lea.sflag [#allocation5], %s430
        %s432 = sand.u32 %s145, 1
        %s433 = smul.addr %s432, 64
        %s434 = scalar_lea.vmem [#allocation8], %s433
        // Predicated region
        $region45: #{tpu_custom_call.1} parent=35 // pred_check
          %p435 = pneg %p155
        $region46: #{tpu_custom_call.1} parent=35 // pred_check_branch
          %437 = sbr.rel (%p435) target = $region48
        $region47: #{tpu_custom_call.1} parent=35 // pred_region
          %s438 = smul.u32 8, %s30
          %s440 = ssub.s32 1024, 1024
          %441 = vsyncadd %s431, %s440
          %s442 = smul.addr %s29, 8
          %s443 = sadd.s32 %s438, %s442
          %s444 = smul.addr %s443, 128
          %s445 = scalar_lea.hbm %s4, %s444
          %s447 = sshll.u32 %s434, 4
          %s448 = int_to_ptr.vmem [resolvable:$true] %s447
          %450 = dma.vmem_to_hbm [thread:$0]  %s448, 1024, %s445, %s431
        $region48: #{tpu_custom_call.1} parent=35 // pred_fallthru
          _
      $region36: #{tpu_custom_call.1} parent=5 // pred_fallthru
        _
      %p451 = scmp.le.s32.totalorder 2, %s20
      // Predicated region
      $region49: #{tpu_custom_call.1} parent=5 // pred_check
        %p452 = pneg %p451
      $region50: #{tpu_custom_call.1} parent=5 // pred_check_branch
        %454 = sbr.rel (%p452) target = $region52
      $region51: #{tpu_custom_call.1} parent=5 // pred_region
        %s455 = ssub.s32 %s20, 2
        // Predicated region
        $region53: #{tpu_custom_call.1} parent=51 // pred_check
          %p456 = pneg %p161
        $region54: #{tpu_custom_call.1} parent=51 // pred_check_branch
          %458 = sbr.rel (%p456) target = $region56
        $region55: #{tpu_custom_call.1} parent=51 // pred_region
          %s459 = sand.u32 %s146, 1
          %s460 = scalar_lea.sflag [#allocation5], %s459
          %s461 = sand.u32 %s146, 1
          %s462 = smul.addr %s461, 64
          %s463 = scalar_lea.vmem [#allocation8], %s462
          %464 = dma.done %s460, 1024
        $region56: #{tpu_custom_call.1} parent=51 // pred_fallthru
          _
      $region52: #{tpu_custom_call.1} parent=5 // pred_fallthru
        _
    $region6: #{tpu_custom_call.1} parent=1 // loop_footer
      %s24 = sadd.s32 1, %s20
    $region7: #{tpu_custom_call.1} parent=1 // loop_footer_branch
      %19 = sbr.rel target = $region3
    $region8: #{tpu_custom_call.1} parent=1 // loop_exit
      _
    %465 = vsyncpa [#allocation4], 1
    %s466 = scalar_lea.sflag [#allocation4], 1
    %467 = vsyncpa %s466, 1
    %468 = vsyncpa [#allocation7], 1
    %s469 = scalar_lea.sflag [#allocation7], 1
    %470 = vsyncpa %s469, 1
    %471 = vsyncpa [#allocation5], 1
    %s472 = scalar_lea.sflag [#allocation5], 1
    %473 = vsyncpa %s472, 1

</llo_original>
